<compile_context>
chip_gen: v5e
topology: v5e:2x2
jax: 0.10.0
libtpu: 0.0.40
codegen_flags: <defaults>
</compile_context>

<pallas_src>
import functools

import jax
import jax.numpy as jnp
from jax import lax
from jax.experimental import pallas as pl
from jax.experimental.pallas import tpu as pltpu

LANES = 128
CHUNK_ROWS = 256        # 256x128 f32 sub-chunk: temporaries stay (mostly) in the 64-vreg file.
BLOCK_ROWS_MAX = 8192   # (8192,128) f32 x/t blocks, double-buffered ~= 16 MiB VMEM.


def _round_up(a, b):
    return ((a + b - 1) // b) * b


def _focal_partial_kernel(x_ref, t_ref, out_ref, *, block_rows, chunk_rows, n_rows,
                          num_blocks, has_partial, ignore_value):
    """One grid step: fold a (block_rows, 128) tile into an (8,128) partial BCE sum / valid count."""
    i = pl.program_id(0)
    nchunks = block_rows // chunk_rows

    def chunk_partial(c, masked):
        if isinstance(c, int):
            start = c * chunk_rows
        else:
            start = pl.multiple_of(c * chunk_rows, chunk_rows)
        x = x_ref[pl.ds(start, chunk_rows), :].astype(jnp.float32)
        traw = t_ref[pl.ds(start, chunk_rows), :]
        valid = traw != jnp.asarray(ignore_value, dtype=traw.dtype)
        if masked:
            # Partial last block only: mask rows that run past the end of the array (the DMA
            # leaves those VMEM rows undefined, so they must never reach the sum).
            row = lax.broadcasted_iota(jnp.int32, (chunk_rows, LANES), 0)
            in_bounds = (i * block_rows + start + row) < n_rows
            valid = valid & in_bounds
        t = traw.astype(jnp.float32)
        # Fused BCE-with-logits; for binary t the single clamp == torch's per-term -100 log clamp.
        bce = jnp.minimum(jnp.maximum(x, 0.0) - x * t + jnp.log1p(jnp.exp(-jnp.abs(x))), 100.0)
        # where (not multiply): garbage / ignored entries can never poison the sum with NaN/Inf.
        bce = jnp.where(valid, bce, 0.0)
        validf = valid.astype(jnp.float32)
        # Fold the chunk down to one (8,128) vreg per quantity: pure VPU cross-vreg adds.
        s = jnp.sum(bce.reshape(chunk_rows // 8, 8, LANES), axis=0)
        cnt = jnp.sum(validf.reshape(chunk_rows // 8, 8, LANES), axis=0)
        return s, cnt

    def body(masked):
        if nchunks == 1:
            s, cnt = chunk_partial(0, masked)
        else:
            def step(c, acc):
                s_c, cnt_c = chunk_partial(c, masked)
                return acc[0] + s_c, acc[1] + cnt_c
            init = (jnp.zeros((8, LANES), jnp.float32), jnp.zeros((8, LANES), jnp.float32))
            s, cnt = lax.fori_loop(0, nchunks, step, init)
        out_ref[0, :, :] = s
        out_ref[1, :, :] = cnt

    if not has_partial:
        body(False)                       # no block ever runs off the array: fast path everywhere
    elif num_blocks == 1:
        body(True)                        # single (partial) block: masked path only
    else:
        is_last = i == (num_blocks - 1)   # only the final block is partial

        @pl.when(jnp.logical_not(is_last))
        def _():
            body(False)

        @pl.when(is_last)
        def _():
            body(True)


def focal_loss(inputs, targets, ignore_index=255, alpha=0.25, gamma=2.0):
    """inputs: logits, any shape/float dtype (e.g. NCHW). targets: same shape, {0,1} or ignore_index."""
    x = inputs.reshape(-1)       # keep caller dtype (bf16 stays bf16; upcast happens per-chunk in-kernel)
    t = targets.reshape(-1)      # keep caller dtype; ignore-comparison happens in-kernel
    n = x.shape[0]

    if jnp.issubdtype(t.dtype, jnp.floating):
        ignore_value = float(ignore_index)
    else:
        ignore_value = int(ignore_index)

    # Row / block geometry: rows of 128 lanes.
    n_rows = pl.cdiv(n, LANES)
    if n_rows <= CHUNK_ROWS:
        # Tiny input: make the row count a multiple of 8 so the sublane fold works (cheap pad).
        n_rows = _round_up(max(n_rows, 8), 8)
        block_rows = n_rows
        chunk_rows = n_rows
    else:
        block_rows = min(BLOCK_ROWS_MAX, _round_up(n_rows, CHUNK_ROWS))
        chunk_rows = CHUNK_ROWS

    padded = n_rows * LANES
    if padded != n:
        # Rare fallback (numel not already row-aligned): pad tail is marked ignore_index so it
        # drops out of both the sum and the count.  Common NCHW sizes skip this copy entirely.
        x = jnp.pad(x, (0, padded - n))
        t = jnp.pad(t, (0, padded - n), constant_values=ignore_value)

    x2 = x.reshape(n_rows, LANES)
    t2 = t.reshape(n_rows, LANES)

    num_blocks = pl.cdiv(n_rows, block_rows)
    has_partial = (n_rows % block_rows) != 0

    kernel = functools.partial(
        _focal_partial_kernel,
        block_rows=block_rows, chunk_rows=chunk_rows, n_rows=n_rows,
        num_blocks=num_blocks, has_partial=has_partial, ignore_value=ignore_value)

    parts = pl.pallas_call(
        kernel,
        out_shape=jax.ShapeDtypeStruct((num_blocks, 2, 8, LANES), jnp.float32),
        grid=(num_blocks,),
        in_specs=[
            pl.BlockSpec((block_rows, LANES), lambda i: (i, 0)),
            pl.BlockSpec((block_rows, LANES), lambda i: (i, 0)),
        ],
        out_specs=pl.BlockSpec((None, 2, 8, LANES), lambda i: (i, 0, 0, 0)),
        compiler_params=pltpu.CompilerParams(
            dimension_semantics=("parallel",),
            vmem_limit_bytes=32 * 1024 * 1024,
        ),
    )(x2, t2)

    # Tiny global reduce + focal transform (negligible next to the mem-bound kernel).
    total = jnp.sum(parts[:, 0])
    count = jnp.sum(parts[:, 1])   # 0 if everything is ignore_index -> NaN, same as torch's empty mean.
    mean_bce = total / count
    one_m = 1.0 - jnp.exp(-mean_bce)
    if float(gamma) == 2.0:
        pw = one_m * one_m          # avoids pow's exp/log path and the pow(0) NaN edge
    else:
        pw = one_m ** gamma
    return jnp.float32(alpha) * pw * mean_bce


def _focal_loss_ref(inputs, targets, ignore_index=255, alpha=0.25, gamma=2.0):
    p = jnp.clip(jax.nn.sigmoid(inputs.astype(jnp.float32)), 0.0, 1.0)
    t = targets.astype(jnp.float32)
    valid = t != float(ignore_index)
    log_p = jnp.maximum(jnp.log(p), -100.0)
    log_1mp = jnp.maximum(jnp.log(1.0 - p), -100.0)
    bce_el = -(t * log_p + (1.0 - t) * log_1mp)
    bce = jnp.sum(jnp.where(valid, bce_el, 0.0)) / jnp.sum(valid.astype(jnp.float32))
    return alpha * (1.0 - jnp.exp(-bce)) ** gamma * bce


def _make_case(key, shape, logits_dtype):
    k1, k2, k3 = jax.random.split(key, 3)
    logits = jax.random.normal(k1, shape, dtype=jnp.float32).astype(logits_dtype)
    targets = jax.random.bernoulli(k2, 0.5, shape).astype(jnp.float32)
    ignore_mask = jax.random.uniform(k3, shape) < 0.1
    targets = jnp.where(ignore_mask, 255.0, targets)
    return logits, targets


if __name__ == "__main__":
    key = jax.random.PRNGKey(0)
    keys = jax.random.split(key, 3)

    cases = [
        ((2, 4, 16, 16), jnp.float32),    # primary shape: single small block, fast path
        ((2, 1, 160, 160), jnp.bfloat16), # bf16 logits, chunked fori_loop + masked partial block
        ((3, 5, 7, 11), jnp.float32),     # numel not a multiple of 128: pad-with-ignore fallback
    ]

    for k, (shape, dt) in zip(keys, cases):
        logits, targets = _make_case(k, shape, dt)
        loss = jax.block_until_ready(focal_loss(logits, targets))
        ref = jax.block_until_ready(_focal_loss_ref(logits, targets))
        assert jnp.allclose(loss, ref, rtol=1e-4, atol=1e-6), (shape, dt, loss, ref)

    print("KERNEL_OK")
</pallas_src>

<mosaic_0001>
module attributes {stable_mosaic.version = 11 : i64} {
  func.func @_focal_partial_kernel(%arg0: i32, %arg1: memref<16x128xf32, #tpu.memory_space<vmem>>, %arg2: memref<16x128xf32, #tpu.memory_space<vmem>>, %arg3: memref<1x2x8x128xf32, #tpu.memory_space<vmem>>) attributes {dimension_semantics = [#tpu.dimension_semantics<parallel>], iteration_bounds = array<i64: 1>, scalar_prefetch = 0 : i64, scratch_operands = 0 : i64, tpu.core_type = #tpu.core_type<tc>, window_params = [{transform_indices = @transform_0, window_bounds = array<i64: 16, 128>}, {transform_indices = @transform_1, window_bounds = array<i64: 16, 128>}, {transform_indices = @transform_2, window_bounds = array<i64: 1, 2, 8, 128>}]} {
    %c0 = arith.constant 0 : index
    %c0_0 = arith.constant 0 : index
    %0 = vector.load %arg1[%c0, %c0_0] : memref<16x128xf32, #tpu.memory_space<vmem>>, vector<16x128xf32>
    %c0_1 = arith.constant 0 : index
    %c0_2 = arith.constant 0 : index
    %1 = vector.load %arg2[%c0_1, %c0_2] : memref<16x128xf32, #tpu.memory_space<vmem>>, vector<16x128xf32>
    %cst = arith.constant 2.550000e+02 : f32
    %2 = vector.broadcast %cst : f32 to vector<16x128xf32>
    %3 = arith.cmpf one, %1, %2 : vector<16x128xf32>
    %cst_3 = arith.constant 0.000000e+00 : f32
    %4 = vector.broadcast %cst_3 : f32 to vector<16x128xf32>
    %5 = arith.maximumf %0, %4 : vector<16x128xf32>
    %6 = arith.mulf %0, %1 : vector<16x128xf32>
    %7 = arith.subf %5, %6 : vector<16x128xf32>
    %8 = math.absf %0 : vector<16x128xf32>
    %cst_4 = arith.constant 0.000000e+00 : f32
    %9 = vector.broadcast %cst_4 : f32 to vector<16x128xf32>
    %10 = arith.subf %9, %8 : vector<16x128xf32>
    %11 = math.exp %10 : vector<16x128xf32>
    %12 = math.log1p %11 : vector<16x128xf32>
    %13 = arith.addf %7, %12 : vector<16x128xf32>
    %cst_5 = arith.constant 1.000000e+02 : f32
    %14 = vector.broadcast %cst_5 : f32 to vector<16x128xf32>
    %15 = arith.minimumf %13, %14 : vector<16x128xf32>
    %cst_6 = arith.constant 0.000000e+00 : f32
    %16 = vector.broadcast %cst_6 : f32 to vector<16x128xf32>
    %17 = arith.select %3, %15, %16 : vector<16x128xi1>, vector<16x128xf32>
    %18 = arith.extui %3 : vector<16x128xi1> to vector<16x128xi32>
    %19 = arith.sitofp %18 : vector<16x128xi32> to vector<16x128xf32>
    %20 = vector.shape_cast %17 : vector<16x128xf32> to vector<2x8x128xf32>
    %cst_7 = arith.constant dense<0.000000e+00> : vector<8x128xf32>
    %21 = vector.multi_reduction <add>, %20, %cst_7 [0] : vector<2x8x128xf32> to vector<8x128xf32>
    %22 = vector.shape_cast %19 : vector<16x128xf32> to vector<2x8x128xf32>
    %cst_8 = arith.constant dense<0.000000e+00> : vector<8x128xf32>
    %23 = vector.multi_reduction <add>, %22, %cst_8 [0] : vector<2x8x128xf32> to vector<8x128xf32>
    %c0_9 = arith.constant 0 : index
    %c0_10 = arith.constant 0 : index
    %c0_11 = arith.constant 0 : index
    %c0_12 = arith.constant 0 : index
    %24 = vector.load %arg3[%c0_9, %c0_10, %c0_11, %c0_12] : memref<1x2x8x128xf32, #tpu.memory_space<vmem>>, vector<1x1x8x128xf32>
    %25 = vector.shape_cast %24 : vector<1x1x8x128xf32> to vector<8x128xf32>
    %26 = vector.shape_cast %21 : vector<8x128xf32> to vector<1x1x8x128xf32>
    tpu.vector_store %arg3[%c0_9, %c0_10, %c0_11, %c0_12], %26 {strides = array<i32>} : memref<1x2x8x128xf32, #tpu.memory_space<vmem>>, vector<1x1x8x128xf32>,
    %c0_13 = arith.constant 0 : index
    %c1 = arith.constant 1 : index
    %c0_14 = arith.constant 0 : index
    %c0_15 = arith.constant 0 : index
    %27 = vector.load %arg3[%c0_13, %c1, %c0_14, %c0_15] : memref<1x2x8x128xf32, #tpu.memory_space<vmem>>, vector<1x1x8x128xf32>
    %28 = vector.shape_cast %27 : vector<1x1x8x128xf32> to vector<8x128xf32>
    %29 = vector.shape_cast %23 : vector<8x128xf32> to vector<1x1x8x128xf32>
    tpu.vector_store %arg3[%c0_13, %c1, %c0_14, %c0_15], %29 {strides = array<i32>} : memref<1x2x8x128xf32, #tpu.memory_space<vmem>>, vector<1x1x8x128xf32>,
    return
  }
  func.func @transform_0(%arg0: i32) -> (i32, i32) {
    %c0_i32 = arith.constant 0 : i32
    %c0_i32_0 = arith.constant 0 : i32
    return %arg0, %c0_i32 : i32, i32
  }
  func.func @transform_1(%arg0: i32) -> (i32, i32) {
    %c0_i32 = arith.constant 0 : i32
    %c0_i32_0 = arith.constant 0 : i32
    return %arg0, %c0_i32 : i32, i32
  }
  func.func @transform_2(%arg0: i32) -> (i32, i32, i32, i32) {
    %c0_i32 = arith.constant 0 : i32
    %c0_i32_0 = arith.constant 0 : i32
    %c0_i32_1 = arith.constant 0 : i32
    %c0_i32_2 = arith.constant 0 : i32
    return %arg0, %c0_i32, %c0_i32_0, %c0_i32_1 : i32, i32, i32, i32
  }
}

</mosaic_0001>

<llo_original>
// kernel: tpu_custom_call.1
$region0: #{tpu_custom_call.1}
  #allocation0 [shape = 'u32[]', space=smem, size = 0x4, offset = 0x4, fixed_abs, tag = 'smem constant byte address 0x4 - core index']
  #allocation1 [shape = 'u32[72,128]{1,0:T(1,128)}', space=vmem, size = 0x9000, scoped, tag = 'internal scratch']
  %s0 = inlined_call_operand.hbm [shape: f32[16,128], index: 0, kind: input, shape index: {}]
  %s1 = inlined_call_operand.hbm [shape: f32[16,128], index: 1, kind: input, shape index: {}]
  %s2 = inlined_call_operand.hbm [shape: f32[1,2,8,128], index: 2, kind: output, shape index: {}]
  %s3 = sld [smem:[#allocation0]]
  $region26: #{tpu_custom_call.1} parent=0
    _
  %s5 = ssub.s32 1, %s3
  %s6 = scalar_select 0, %s5, %s3
  $region1: #{tpu_custom_call.1} parent=0
    #allocation2 [shape = 'u8[8192]{0}', space=vmem, size = 0x2000, scoped, tag = 'input window, operand 0, single buffered']
    #allocation3 [shape = 's32[1]{0}', space=sflag, size = 0x4, scoped, tag = 'scoped memory for tpu_custom_call.1']
    #allocation4 [shape = 's32[1]{0}', space=sflag, size = 0x4, scoped, tag = 'scoped memory for tpu_custom_call.1']
    #allocation5 [shape = 'u8[8192]{0}', space=vmem, size = 0x2000, scoped, tag = 'input window, operand 1, single buffered']
    #allocation6 [shape = 's32[1]{0}', space=sflag, size = 0x4, scoped, tag = 'scoped memory for tpu_custom_call.1']
    #allocation7 [shape = 'u8[8192]{0}', space=vmem, size = 0x2000, scoped, tag = 'output window, operand 0, single buffered']
    %7 = vsyncpa [#allocation3], 0
    %8 = vsyncpa [#allocation6], 0
    %9 = vsyncpa [#allocation4], 0
    // Predicated region
    $region2: #{tpu_custom_call.1} parent=1 // pred_check
      _
    $region3: #{tpu_custom_call.1} parent=1 // pred_check_branch
      %11 = sbr.rel (0) target = $region5
    $region4: #{tpu_custom_call.1} parent=1 // pred_region
      %13 = vsyncadd [#allocation3], 0
      %s14 = sshll.u32 %s0, 4
      %s15 = int_to_ptr.hbm [resolvable:$true] %s14
      %s16 = sshll.u32 [#allocation2], 4
      %s17 = int_to_ptr.vmem [resolvable:$true] %s16
      %22 = dma.hbm_to_vmem [thread:$0]  %s15, 256, %s17, [#allocation3], 128, 128, 8
    $region5: #{tpu_custom_call.1} parent=1 // pred_fallthru
      _
    // Predicated region
    $region6: #{tpu_custom_call.1} parent=1 // pred_check
      _
    $region7: #{tpu_custom_call.1} parent=1 // pred_check_branch
      %24 = sbr.rel (0) target = $region9
    $region8: #{tpu_custom_call.1} parent=1 // pred_region
      %26 = vsyncadd [#allocation6], 0
      %s27 = sshll.u32 %s1, 4
      %s28 = int_to_ptr.hbm [resolvable:$true] %s27
      %s29 = sshll.u32 [#allocation5], 4
      %s30 = int_to_ptr.vmem [resolvable:$true] %s29
      %35 = dma.hbm_to_vmem [thread:$0]  %s28, 256, %s30, [#allocation6], 128, 128, 8
    $region9: #{tpu_custom_call.1} parent=1 // pred_fallthru
      _
    // Predicated region
    $region10: #{tpu_custom_call.1} parent=1 // pred_check
      _
    $region11: #{tpu_custom_call.1} parent=1 // pred_check_branch
      %37 = sbr.rel (0) target = $region13
    $region12: #{tpu_custom_call.1} parent=1 // pred_region
      %39 = dma.done [#allocation3], 256
    $region13: #{tpu_custom_call.1} parent=1 // pred_fallthru
      _
    // Predicated region
    $region14: #{tpu_custom_call.1} parent=1 // pred_check
      _
    $region15: #{tpu_custom_call.1} parent=1 // pred_check_branch
      %41 = sbr.rel (0) target = $region17
    $region16: #{tpu_custom_call.1} parent=1 // pred_region
      %43 = dma.done [#allocation6], 256
    $region17: #{tpu_custom_call.1} parent=1 // pred_fallthru
      _
    %v44 = vld [vmem:[#allocation2] sm:$0xff]
    %v45 = vld [vmem:[#allocation2 + $0x8] sm:$0xff]
    %v46 = vld [vmem:[#allocation5] sm:$0xff]
    %v47 = vld [vmem:[#allocation5 + $0x8] sm:$0xff]
    %vm48 = vcmp.ne.f32.partialorder %v46, 255.0
    %vm49 = vcmp.ne.f32.partialorder %v47, 255.0
    %v50 = vmax.f32 %v44, 0.0
    %v51 = vmax.f32 %v45, 0.0
    %v52 = vmul.f32 %v44, %v46
    %v53 = vmul.f32 %v45, %v47
    %v54 = vsub.f32 %v50, %v52
    %v55 = vsub.f32 %v51, %v53
    %v56 = vand.u32 2147483647, %v44
    %v57 = vand.u32 2147483647, %v45
    %v58 = vsub.f32 0.0, %v56
    %v59 = vsub.f32 0.0, %v57
    %v60 = vmul.f32 %v58, 1.442695
    %v61 = vpow.pop %v60
    %v62 = vmul.f32 %v59, 1.442695
    %v63 = vpow.pop %v62
    %v64 = vadd.f32 %v61, 1.0
    %v65 = vlog2.pop %v64
    %v66 = vmul.f32 %v65, 0.6931472
    %v67 = vmul.f32 -0.5, %v61
    %v68 = vadd.f32 %v67, 1.0
    %v69 = vmul.f32 %v68, %v61
    %v70 = vand.u32 2147483647, %v61
    %vm71 = vcmp.lt.f32.partialorder %v70, 0.0004427343
    %v72 = vsel %vm71, %v69, %v66
    %v73 = vadd.f32 %v63, 1.0
    %v74 = vlog2.pop %v73
    %v75 = vmul.f32 %v74, 0.6931472
    %v76 = vmul.f32 -0.5, %v63
    %v77 = vadd.f32 %v76, 1.0
    %v78 = vmul.f32 %v77, %v63
    %v79 = vand.u32 2147483647, %v63
    %vm80 = vcmp.lt.f32.partialorder %v79, 0.0004427343
    %v81 = vsel %vm80, %v78, %v75
    %v82 = vadd.f32 %v54, %v72
    %v83 = vadd.f32 %v55, %v81
    %v84 = vmin.f32 %v82, 100.0
    %v85 = vmin.f32 %v83, 100.0
    %v86 = vsel %vm48, %v84, 0.0
    %v87 = vsel %vm49, %v85, 0.0
    %v88 = vsel %vm48, 1, 0
    %v89 = vsel %vm49, 1, 0
    %v90 = vcvt.s32.f32 %v88
    %v91 = vcvt.s32.f32 %v89
    %v92 = vadd.f32 %v86, %v87
    %v93 = vadd.f32 %v90, %v91
    %94 = vst [vmem:[#allocation7] sm:$0xff] %v92
    %s95 = scalar_lea.vmem [#allocation7], 8
    %96 = vst [vmem:[%s95] sm:$0xff] %v93
    // Predicated region
    $region18: #{tpu_custom_call.1} parent=1 // pred_check
      _
    $region19: #{tpu_custom_call.1} parent=1 // pred_check_branch
      %98 = sbr.rel (0) target = $region21
    $region20: #{tpu_custom_call.1} parent=1 // pred_region
      %100 = vsyncadd [#allocation4], 0
      %s101 = sshll.u32 [#allocation7], 4
      %s102 = int_to_ptr.vmem [resolvable:$true] %s101
      %s103 = sshll.u32 %s2, 4
      %s104 = int_to_ptr.hbm [resolvable:$true] %s103
      %109 = dma.vmem_to_hbm [thread:$0]  %s102, 256, %s104, [#allocation4], 128, 128, 8
    $region21: #{tpu_custom_call.1} parent=1 // pred_fallthru
      _
    // Predicated region
    $region22: #{tpu_custom_call.1} parent=1 // pred_check
      _
    $region23: #{tpu_custom_call.1} parent=1 // pred_check_branch
      %111 = sbr.rel (0) target = $region25
    $region24: #{tpu_custom_call.1} parent=1 // pred_region
      %113 = dma.done [#allocation4], 256
    $region25: #{tpu_custom_call.1} parent=1 // pred_fallthru
      _
    %114 = vsyncpa [#allocation3], 1
    %115 = vsyncpa [#allocation6], 1
    %116 = vsyncpa [#allocation4], 1

</llo_original>
